<compile_context>
chip_gen: v6e
topology: v6e:2x2x1
jax: 0.10.0
libtpu: 0.0.40
codegen_flags: <defaults>
</compile_context>

<pallas_src>
import functools

import jax
import jax.numpy as jnp
import numpy as np
from jax.experimental import pallas as pl
from jax.experimental.pallas import tpu as pltpu

FOCAL_ALPHA = 0.25
FOCAL_GAMMA = 2.0  # gamma == 2 -> implemented as an explicit square in the kernel

_LANES = 128


def _round_up(x, m):
    return ((x + m - 1) // m) * m


def _num_tensorcores():
    """Best-effort TensorCore count (v7x: 2). Falls back to 2 (harmless on 1-TC chips)."""
    try:
        info = pltpu.get_tpu_info()
        for name in ("num_cores", "core_count", "num_tensorcores", "tensorcore_count"):
            v = getattr(info, name, None)
            if isinstance(v, int) and v >= 1:
                return v
    except Exception:
        pass
    return 2


# ---------------------------------------------------------------------------
# Kernel 1: masked L1 for 'coords'
#   loss = sum(|p - t| * (t >= 0)) / sum(t >= 0)
# Lane+sublane-dense (tile_rows, 128) tiles; ragged tail masked in-kernel so the
# wrapper never pads up to a multiple of the tile.
# ---------------------------------------------------------------------------
def _coords_l1_kernel(pred_ref, tgt_ref, out_ref, loss_acc, cnt_acc, *,
                      n_rows, tile_rows):
    i = pl.program_id(0)

    @pl.when(i == 0)
    def _init():
        loss_acc[...] = jnp.zeros_like(loss_acc)
        cnt_acc[...] = jnp.zeros_like(cnt_acc)

    pred = pred_ref[...].astype(jnp.float32)          # (TR, 128)
    tgt = tgt_ref[...].astype(jnp.float32)            # (TR, 128)

    # In-kernel ragged-tail mask: rows past the real data (clipped trailing block
    # or host row padding) contribute nothing.
    row = jax.lax.broadcasted_iota(jnp.int32, pred.shape, 0) + i * tile_rows
    ok = jnp.logical_and(row < n_rows, tgt >= 0.0)

    # jnp.where (not multiply) so stale values in clipped blocks can never leak
    # NaN/Inf into the accumulators.
    loss_acc[...] += jnp.where(ok, jnp.abs(pred - tgt), 0.0)
    cnt_acc[...] += jnp.where(ok, 1.0, 0.0)

    @pl.when(i == pl.num_programs(0) - 1)
    def _finalize():
        out_ref[...] = (jnp.sum(loss_acc[...], keepdims=True)
                        / jnp.sum(cnt_acc[...], keepdims=True))


def coords_masked_l1(pred, target, max_tile_rows=2048):
    """sum(|pred - target| * (target >= 0)) / sum(target >= 0)."""
    n_elems = int(pred.size)
    rows = pl.cdiv(n_elems, _LANES)                   # real data rows
    rows_arr = _round_up(rows, 8)                     # host array rows (sublane aligned)
    tile_rows = min(_round_up(int(max_tile_rows), 8), rows_arr)
    n_tiles = pl.cdiv(rows_arr, tile_rows)
    pad = rows_arr * _LANES - n_elems

    p_flat = pred.reshape(-1)                         # keep original dtype; cast in-kernel
    t_flat = target.reshape(-1)
    if pad:
        # Minimal pad (< 8 rows + lane remainder); skipped entirely when numel is
        # already a multiple of 8*128.  Ragged tile tails are masked in-kernel.
        p_flat = jnp.pad(p_flat, (0, pad))
        t_flat = jnp.pad(t_flat, (0, pad), constant_values=-1)
    p2 = p_flat.reshape(rows_arr, _LANES)
    t2 = t_flat.reshape(rows_arr, _LANES)

    kernel = functools.partial(_coords_l1_kernel, n_rows=rows, tile_rows=tile_rows)
    out = pl.pallas_call(
        kernel,
        grid=(n_tiles,),
        in_specs=[pl.BlockSpec((tile_rows, _LANES), lambda i: (i, 0)),
                  pl.BlockSpec((tile_rows, _LANES), lambda i: (i, 0))],
        out_specs=pl.BlockSpec((1, 1), lambda i: (0, 0)),
        out_shape=jax.ShapeDtypeStruct((1, 1), jnp.float32),
        scratch_shapes=[pltpu.VMEM((tile_rows, _LANES), jnp.float32),
                        pltpu.VMEM((tile_rows, _LANES), jnp.float32)],
        compiler_params=pltpu.CompilerParams(dimension_semantics=("arbitrary",)),
    )(p2, t2)
    return out[0, 0]


# ---------------------------------------------------------------------------
# Kernel 2: softmax focal loss for 'edges'
# Layout: logits (C, rows, 128) (class-separated, sublane+lane dense), targets
# (rows, 128) int8.  Grid (P, n_inner): P is the "parallel" axis (megacore on
# v7x), the inner axis is the sequential reduction.  Each P-slice writes its
# partial (sum, count); the wrapper does the final tiny sum/divide.
# ---------------------------------------------------------------------------
def _focal_kernel(pred_ref, tgt_ref, loss_out_ref, cnt_out_ref, loss_acc, cnt_acc):
    i = pl.program_id(1)
    n_cls = pred_ref.shape[0]

    @pl.when(i == 0)
    def _init():
        loss_acc[...] = jnp.zeros_like(loss_acc)
        cnt_acc[...] = jnp.zeros_like(cnt_acc)

    tgt = tgt_ref[...].astype(jnp.int32)              # (TR, 128)

    # Running max over the small leading class axis: n_cls-1 full-vreg VPU maxes.
    m = pred_ref[0].astype(jnp.float32)
    for c in range(1, n_cls):
        m = jnp.maximum(m, pred_ref[c].astype(jnp.float32))

    # One pass over classes: softmax denominator + target-class gather via selects
    # (no MXU, no cross-lane work).  exp(z) is reused for pt (no exp(logpt)).
    sez = jnp.zeros_like(m)                           # sum_c exp(x_c - m)
    xt = jnp.zeros_like(m)                            # x_target
    ezt = jnp.zeros_like(m)                           # exp(x_target - m)
    for c in range(n_cls):
        xc = pred_ref[c].astype(jnp.float32)
        ec = jnp.exp(xc - m)                          # EUP
        sez = sez + ec
        sel = tgt == c
        xt = jnp.where(sel, xc, xt)
        ezt = jnp.where(sel, ec, ezt)

    logpt = (xt - m) - jnp.log(sez)                   # single log per position
    pt = ezt / sez                                    # exact divide (keeps 1e-5 tol)
    one_m_pt = 1.0 - pt
    fl = (-FOCAL_ALPHA) * one_m_pt * one_m_pt * logpt  # gamma == 2

    valid = tgt >= 0
    loss_acc[...] += jnp.where(valid, fl, 0.0)
    cnt_acc[...] += jnp.where(valid, 1.0, 0.0)

    @pl.when(i == pl.num_programs(1) - 1)
    def _finalize():
        loss_out_ref[...] = jnp.sum(loss_acc[...]).reshape(1, 1, 1)
        cnt_out_ref[...] = jnp.sum(cnt_acc[...]).reshape(1, 1, 1)


def focal_loss(pred, target, max_tile_rows=1024):
    """pred: (N, C) logits; target: (N,) int class ids (< 0 ignored)."""
    N, C = pred.shape
    rows = pl.cdiv(max(N, 1), _LANES)
    tr = min(_round_up(int(max_tile_rows), 32), _round_up(rows, 32))  # int8/bf16-safe tiling
    n_blocks = pl.cdiv(rows, tr)
    rows_pad = n_blocks * tr
    pad = rows_pad * _LANES - N

    # Split the sequential reduction across TensorCores (v7x megacore); pick the
    # largest exact divisor so no core gets a wasted padded step.
    cores = max(1, _num_tensorcores())
    num_par = 1
    for cand in range(min(cores, n_blocks), 0, -1):
        if n_blocks % cand == 0:
            num_par = cand
            break
    n_inner = n_blocks // num_par

    # Class-separated (C, rows, 128) layout: sublane- AND lane-dense tiles.
    # TODO(synk): the transpose is the single remaining host-side HBM pass; for
    # C | 128 it could be replaced by an in-kernel lane de-interleave (pltpu.roll).
    pred_cn = pred.T                                   # (C, N), original dtype
    if pad:
        pred_cn = jnp.pad(pred_cn, ((0, 0), (0, pad)))  # fuses with the transpose copy
    pred_3d = pred_cn.reshape(C, rows_pad, _LANES)

    # int8 targets (class ids are tiny) -> ~4x fewer target HBM bytes.
    if C <= 127:
        tgt_flat = jnp.clip(target, -1, C - 1).astype(jnp.int8)
    else:
        tgt_flat = target.astype(jnp.int32)
    if pad:
        tgt_flat = jnp.pad(tgt_flat, (0, pad), constant_values=-1)
    tgt_2d = tgt_flat.reshape(rows_pad, _LANES)

    loss_sums, cnt_sums = pl.pallas_call(
        _focal_kernel,
        grid=(num_par, n_inner),
        in_specs=[pl.BlockSpec((C, tr, _LANES), lambda p, i: (0, p * n_inner + i, 0)),
                  pl.BlockSpec((tr, _LANES), lambda p, i: (p * n_inner + i, 0))],
        out_specs=[pl.BlockSpec((1, 1, 1), lambda p, i: (p, 0, 0)),
                   pl.BlockSpec((1, 1, 1), lambda p, i: (p, 0, 0))],
        out_shape=[jax.ShapeDtypeStruct((num_par, 1, 1), jnp.float32),
                   jax.ShapeDtypeStruct((num_par, 1, 1), jnp.float32)],
        scratch_shapes=[pltpu.VMEM((tr, _LANES), jnp.float32),
                        pltpu.VMEM((tr, _LANES), jnp.float32)],
        compiler_params=pltpu.CompilerParams(
            dimension_semantics=("parallel", "arbitrary")),
    )(pred_3d, tgt_2d)
    return jnp.sum(loss_sums) / jnp.sum(cnt_sums)


# ---------------------------------------------------------------------------
# EdgeFocalLoss.forward (glue: slicing / reshapes exactly as in the torch code)
# ---------------------------------------------------------------------------
def edge_focal_loss_forward(outputs, targets):
    results = {}
    if 'coords' in outputs:
        pred = outputs['coords']
        max_len = pred.shape[1]
        target = targets['coords'][:, :max_len]
        results['coords'] = coords_masked_l1(pred, target)
    if 'edges' in outputs:
        pred = outputs['edges']
        max_len = pred.shape[-1]
        target = targets['edges'][:, :max_len, :max_len]
        # NOTE: matches the torch module literally: reshape(-1, C) on the raw
        # contiguous (B, C, L, L) buffer (no channels-last permute).
        pred2 = pred.reshape(-1, pred.shape[1])
        tgt2 = target.reshape(-1)
        results['edges'] = focal_loss(pred2, tgt2)
    return results


# ---------------------------------------------------------------------------
# Pure-JAX reference (numerical sanity check only)
# ---------------------------------------------------------------------------
def _reference(outputs, targets):
    res = {}
    pred = outputs['coords']
    target = targets['coords'][:, :pred.shape[1]].astype(jnp.float32)
    mask = (target >= 0).astype(jnp.float32)
    res['coords'] = jnp.sum(jnp.abs(pred.astype(jnp.float32) - target) * mask) / jnp.sum(mask)

    pred = outputs['edges']
    target = targets['edges'][:, :pred.shape[-1], :pred.shape[-1]]
    p = pred.reshape(-1, pred.shape[1]).astype(jnp.float32)
    t = target.reshape(-1, 1).astype(jnp.int32)
    logp = jax.nn.log_softmax(p, axis=-1)
    oh = (jnp.arange(p.shape[1])[None, :] == t).astype(jnp.float32)
    logpt = jnp.sum(logp * oh, axis=-1, keepdims=True)
    pt = jnp.exp(logpt)
    valid = (t >= 0).astype(jnp.float32)
    fl = -FOCAL_ALPHA * (1.0 - pt) ** 2 * logpt
    res['edges'] = jnp.sum(fl * valid) / jnp.sum(valid)
    return res


if __name__ == "__main__":
    key = jax.random.PRNGKey(0)
    k1, k2, k3, k4, k5 = jax.random.split(key, 5)

    # ---- small demo shapes consistent with the module ----
    B, Lp, Lt = 2, 8, 10        # coords: pred len 8, targets padded to len 10
    L, Lt_e, C = 8, 12, 2       # edges: pred (B, C, L, L), targets (B, 12, 12)

    coords_pred = jax.random.uniform(k1, (B, Lp, 2), jnp.float32)
    coords_tgt = jax.random.uniform(k2, (B, Lt, 2), jnp.float32)
    pad_mask = jax.random.bernoulli(k3, 0.2, (B, Lt, 2))
    coords_tgt = jnp.where(pad_mask, -1.0, coords_tgt)      # some ignored entries

    edges_pred = jax.random.normal(k4, (B, C, L, L), jnp.float32)
    edges_tgt = jax.random.bernoulli(k5, 0.3, (B, Lt_e, Lt_e)).astype(jnp.int32)

    outputs = {'coords': coords_pred, 'edges': edges_pred}
    targets = {'coords': coords_tgt, 'edges': edges_tgt}

    results = edge_focal_loss_forward(outputs, targets)
    jax.block_until_ready(results)

    ref = _reference(outputs, targets)
    np.testing.assert_allclose(np.asarray(results['coords']),
                               np.asarray(ref['coords']), rtol=1e-5, atol=1e-6)
    np.testing.assert_allclose(np.asarray(results['edges']),
                               np.asarray(ref['edges']), rtol=1e-5, atol=1e-6)

    # ---- multi-tile / parallel-split / ragged-tail paths with small tiles ----
    k6, k7, k8, k9, k10 = jax.random.split(jax.random.PRNGKey(1), 5)
    B2, C2, L2, Lt2 = 2, 3, 64, 70
    edges_pred2 = jax.random.normal(k6, (B2, C2, L2, L2), jnp.float32)
    edges_tgt2 = jax.random.randint(k7, (B2, Lt2, Lt2), 0, C2).astype(jnp.int32)
    edges_tgt2 = jnp.where(jax.random.bernoulli(k8, 0.15, (B2, Lt2, Lt2)),
                           -1, edges_tgt2)                  # some ignored cells
    coords_pred2 = jax.random.uniform(k9, (4, 300, 2), jnp.float32)
    coords_tgt2 = jax.random.uniform(k10, (4, 320, 2), jnp.float32)
    coords_tgt2 = jnp.where(jax.random.bernoulli(k8, 0.25, (4, 320, 2)),
                            -1.0, coords_tgt2)

    out2 = {'coords': coords_pred2, 'edges': edges_pred2}
    tg2 = {'coords': coords_tgt2, 'edges': edges_tgt2}
    ref2 = _reference(out2, tg2)

    ep = edges_pred2.reshape(-1, edges_pred2.shape[1])
    et = edges_tgt2[:, :L2, :L2].reshape(-1)
    got_edges2 = focal_loss(ep, et, max_tile_rows=32)        # 2 blocks -> parallel split
    got_coords2 = coords_masked_l1(coords_pred2, coords_tgt2[:, :300],
                                   max_tile_rows=16)         # partial trailing block
    np.testing.assert_allclose(np.asarray(got_edges2), np.asarray(ref2['edges']),
                               rtol=1e-5, atol=1e-6)
    np.testing.assert_allclose(np.asarray(got_coords2), np.asarray(ref2['coords']),
                               rtol=1e-5, atol=1e-6)

    print("KERNEL_OK")
</pallas_src>

<mosaic_0001>
module attributes {stable_mosaic.version = 11 : i64} {
  func.func @_coords_l1_kernel(%arg0: i32, %arg1: memref<8x128xf32, #tpu.memory_space<vmem>>, %arg2: memref<8x128xf32, #tpu.memory_space<vmem>>, %arg3: memref<1x1xf32, #tpu.memory_space<vmem>>, %arg4: memref<8x128xf32, #tpu.memory_space<vmem>>, %arg5: memref<8x128xf32, #tpu.memory_space<vmem>>) attributes {dimension_semantics = [#tpu.dimension_semantics<arbitrary>], iteration_bounds = array<i64: 1>, scalar_prefetch = 0 : i64, scratch_operands = 2 : i64, tpu.core_type = #tpu.core_type<tc>, window_params = [{transform_indices = @transform_0, window_bounds = array<i64: 8, 128>}, {transform_indices = @transform_1, window_bounds = array<i64: 8, 128>}, {pipeline_mode = #tpu.pipeline_mode<synchronous>, transform_indices = @transform_2, window_bounds = array<i64: 1, 1>}]} {
    %c0_i32 = arith.constant 0 : i32
    %0 = arith.cmpi eq, %arg0, %c0_i32 : i32
    %1 = arith.extui %0 : i1 to i32
    %c0_i32_0 = arith.constant 0 : i32
    %2 = arith.cmpi ne, %1, %c0_i32_0 : i32
    scf.if %2 {
      %cst_17 = arith.constant 0.000000e+00 : f32
      %30 = vector.broadcast %cst_17 : f32 to vector<8x128xf32>
      %c0_18 = arith.constant 0 : index
      %c0_19 = arith.constant 0 : index
      %31 = vector.load %arg4[%c0_18, %c0_19] : memref<8x128xf32, #tpu.memory_space<vmem>>, vector<8x128xf32>
      tpu.vector_store %arg4[%c0_18, %c0_19], %30 {strides = array<i32>} : memref<8x128xf32, #tpu.memory_space<vmem>>, vector<8x128xf32>,
      %cst_20 = arith.constant 0.000000e+00 : f32
      %32 = vector.broadcast %cst_20 : f32 to vector<8x128xf32>
      %c0_21 = arith.constant 0 : index
      %c0_22 = arith.constant 0 : index
      %33 = vector.load %arg5[%c0_21, %c0_22] : memref<8x128xf32, #tpu.memory_space<vmem>>, vector<8x128xf32>
      tpu.vector_store %arg5[%c0_21, %c0_22], %32 {strides = array<i32>} : memref<8x128xf32, #tpu.memory_space<vmem>>, vector<8x128xf32>,
    } else {
    }
    %c0 = arith.constant 0 : index
    %c0_1 = arith.constant 0 : index
    %3 = vector.load %arg1[%c0, %c0_1] : memref<8x128xf32, #tpu.memory_space<vmem>>, vector<8x128xf32>
    %c0_2 = arith.constant 0 : index
    %c0_3 = arith.constant 0 : index
    %4 = vector.load %arg2[%c0_2, %c0_3] : memref<8x128xf32, #tpu.memory_space<vmem>>, vector<8x128xf32>
    %5 = tpu.iota {dimensions = array<i32: 0>} : vector<8x128xi32>
    %c8_i32 = arith.constant 8 : i32
    %6 = arith.muli %arg0, %c8_i32 : i32
    %7 = vector.broadcast %6 : i32 to vector<8x128xi32>
    %8 = arith.addi %5, %7 : vector<8x128xi32>
    %c1_i32 = arith.constant 1 : i32
    %9 = vector.broadcast %c1_i32 : i32 to vector<8x128xi32>
    %10 = arith.cmpi slt, %8, %9 : vector<8x128xi32>
    %cst = arith.constant 0.000000e+00 : f32
    %11 = vector.broadcast %cst : f32 to vector<8x128xf32>
    %12 = arith.cmpf oge, %4, %11 : vector<8x128xf32>
    %13 = arith.andi %10, %12 : vector<8x128xi1>
    %c0_4 = arith.constant 0 : index
    %c0_5 = arith.constant 0 : index
    %14 = vector.load %arg4[%c0_4, %c0_5] : memref<8x128xf32, #tpu.memory_space<vmem>>, vector<8x128xf32>
    %15 = arith.subf %3, %4 : vector<8x128xf32>
    %16 = math.absf %15 : vector<8x128xf32>
    %cst_6 = arith.constant 0.000000e+00 : f32
    %17 = vector.broadcast %cst_6 : f32 to vector<8x128xf32>
    %18 = arith.select %13, %16, %17 : vector<8x128xi1>, vector<8x128xf32>
    %19 = arith.addf %14, %18 : vector<8x128xf32>
    %c0_7 = arith.constant 0 : index
    %c0_8 = arith.constant 0 : index
    %20 = vector.load %arg4[%c0_7, %c0_8] : memref<8x128xf32, #tpu.memory_space<vmem>>, vector<8x128xf32>
    tpu.vector_store %arg4[%c0_7, %c0_8], %19 {strides = array<i32>} : memref<8x128xf32, #tpu.memory_space<vmem>>, vector<8x128xf32>,
    %c0_9 = arith.constant 0 : index
    %c0_10 = arith.constant 0 : index
    %21 = vector.load %arg5[%c0_9, %c0_10] : memref<8x128xf32, #tpu.memory_space<vmem>>, vector<8x128xf32>
    %cst_11 = arith.constant 1.000000e+00 : f32
    %cst_12 = arith.constant 0.000000e+00 : f32
    %22 = vector.broadcast %cst_11 : f32 to vector<8x128xf32>
    %23 = vector.broadcast %cst_12 : f32 to vector<8x128xf32>
    %24 = arith.select %13, %22, %23 : vector<8x128xi1>, vector<8x128xf32>
    %25 = arith.addf %21, %24 : vector<8x128xf32>
    %c0_13 = arith.constant 0 : index
    %c0_14 = arith.constant 0 : index
    %26 = vector.load %arg5[%c0_13, %c0_14] : memref<8x128xf32, #tpu.memory_space<vmem>>, vector<8x128xf32>
    tpu.vector_store %arg5[%c0_13, %c0_14], %25 {strides = array<i32>} : memref<8x128xf32, #tpu.memory_space<vmem>>, vector<8x128xf32>,
    %c0_i32_15 = arith.constant 0 : i32
    %27 = arith.cmpi eq, %arg0, %c0_i32_15 : i32
    %28 = arith.extui %27 : i1 to i32
    %c0_i32_16 = arith.constant 0 : i32
    %29 = arith.cmpi ne, %28, %c0_i32_16 : i32
    scf.if %29 {
      %c0_17 = arith.constant 0 : index
      %c0_18 = arith.constant 0 : index
      %30 = vector.load %arg4[%c0_17, %c0_18] : memref<8x128xf32, #tpu.memory_space<vmem>>, vector<8x128xf32>
      %31 = vector.shape_cast %30 : vector<8x128xf32> to vector<1x8x128xf32>
      %cst_19 = arith.constant dense<0.000000e+00> : vector<1xf32>
      %32 = vector.multi_reduction <add>, %31, %cst_19 [1, 2] : vector<1x8x128xf32> to vector<1xf32>
      %33 = vector.shape_cast %32 : vector<1xf32> to vector<1x1x1xf32>
      %34 = vector.extract %33[0, 0, 0] : f32 from vector<1x1x1xf32>
      %35 = vector.broadcast %34 : f32 to vector<1x1xf32>
      %c0_20 = arith.constant 0 : index
      %c0_21 = arith.constant 0 : index
      %36 = vector.load %arg5[%c0_20, %c0_21] : memref<8x128xf32, #tpu.memory_space<vmem>>, vector<8x128xf32>
      %37 = vector.shape_cast %36 : vector<8x128xf32> to vector<1x8x128xf32>
      %cst_22 = arith.constant dense<0.000000e+00> : vector<1xf32>
      %38 = vector.multi_reduction <add>, %37, %cst_22 [1, 2] : vector<1x8x128xf32> to vector<1xf32>
      %39 = vector.shape_cast %38 : vector<1xf32> to vector<1x1x1xf32>
      %40 = vector.extract %39[0, 0, 0] : f32 from vector<1x1x1xf32>
      %41 = vector.broadcast %40 : f32 to vector<1x1xf32>
      %42 = arith.divf %35, %41 : vector<1x1xf32>
      %c0_23 = arith.constant 0 : index
      %c0_24 = arith.constant 0 : index
      %43 = vector.load %arg3[%c0_23, %c0_24] : memref<1x1xf32, #tpu.memory_space<vmem>>, vector<1x1xf32>
      tpu.vector_store %arg3[%c0_23, %c0_24], %42 {strides = array<i32>} : memref<1x1xf32, #tpu.memory_space<vmem>>, vector<1x1xf32>,
    } else {
    }
    return
  }
  func.func @transform_0(%arg0: i32) -> (i32, i32) {
    %c0_i32 = arith.constant 0 : i32
    %c0_i32_0 = arith.constant 0 : i32
    return %arg0, %c0_i32 : i32, i32
  }
  func.func @transform_1(%arg0: i32) -> (i32, i32) {
    %c0_i32 = arith.constant 0 : i32
    %c0_i32_0 = arith.constant 0 : i32
    return %arg0, %c0_i32 : i32, i32
  }
  func.func @transform_2(%arg0: i32) -> (i32, i32) {
    %c0_i32 = arith.constant 0 : i32
    %c0_i32_0 = arith.constant 0 : i32
    %c0_i32_1 = arith.constant 0 : i32
    return %c0_i32, %c0_i32_0 : i32, i32
  }
}

</mosaic_0001>

<llo_original>
// kernel: tpu_custom_call.1
$region0: #{tpu_custom_call.1}
  #allocation0 [shape = 'u32[]', space=smem, size = 0x4, offset = 0x4, fixed_abs, tag = 'smem constant byte address 0x4 - core index']
  #allocation1 [shape = 'u32[144,128]{1,0:T(1,128)}', space=vmem, size = 0x12000, scoped, tag = 'internal scratch']
  #allocation2 [shape = 'f32[8,128]{1,0:T(8,128)}', space=vmem, size = 0x1000, scoped, tag = 'scratch operand']
  #allocation3 [shape = 'f32[8,128]{1,0:T(8,128)}', space=vmem, size = 0x1000, scoped, tag = 'scratch operand']
  %s0 = inlined_call_operand.hbm [shape: f32[8,128], index: 0, kind: input, shape index: {}]
  %s1 = inlined_call_operand.hbm [shape: f32[8,128], index: 1, kind: input, shape index: {}]
  %s2 = inlined_call_operand.hbm [shape: f32[1,1], index: 2, kind: output, shape index: {}]
  %s3 = sld [smem:[#allocation0]]
  $region34: #{tpu_custom_call.1} parent=0
    _
  %s5 = ssub.s32 1, %s3
  %s6 = scalar_select 0, %s5, %s3
  $region1: #{tpu_custom_call.1} parent=0
    #allocation4 [shape = 'u8[4096]{0}', space=vmem, size = 0x1000, scoped, tag = 'input window, operand 0, single buffered']
    #allocation5 [shape = 's32[1]{0}', space=sflag, size = 0x4, scoped, tag = 'scoped memory for tpu_custom_call.1']
    #allocation6 [shape = 's32[1]{0}', space=sflag, size = 0x4, scoped, tag = 'scoped memory for tpu_custom_call.1']
    #allocation7 [shape = 'u8[4096]{0}', space=vmem, size = 0x1000, scoped, tag = 'input window, operand 1, single buffered']
    #allocation8 [shape = 's32[1]{0}', space=sflag, size = 0x4, scoped, tag = 'scoped memory for tpu_custom_call.1']
    #allocation9 [shape = 'u8[512]{0}', space=vmem, size = 0x400, scoped, tag = 'output window, operand 0, single buffered']
    %7 = vsyncpa [#allocation5], 0
    %8 = vsyncpa [#allocation8], 0
    %9 = vsyncpa [#allocation6], 0
    // Predicated region
    $region2: #{tpu_custom_call.1} parent=1 // pred_check
      _
    $region3: #{tpu_custom_call.1} parent=1 // pred_check_branch
      %11 = sbr.rel (0) target = $region5
    $region4: #{tpu_custom_call.1} parent=1 // pred_region
      %s13 = ssub.s32 128, 128
      %14 = vsyncadd [#allocation5], %s13
      %s16 = sshll.u32 [#allocation4], 4
      %s17 = int_to_ptr.vmem [resolvable:$true] %s16
      %19 = dma.hbm_to_vmem [thread:$0]  %s0, 128, %s17, [#allocation5]
    $region5: #{tpu_custom_call.1} parent=1 // pred_fallthru
      _
    // Predicated region
    $region6: #{tpu_custom_call.1} parent=1 // pred_check
      _
    $region7: #{tpu_custom_call.1} parent=1 // pred_check_branch
      %21 = sbr.rel (0) target = $region9
    $region8: #{tpu_custom_call.1} parent=1 // pred_region
      %s23 = ssub.s32 128, 128
      %24 = vsyncadd [#allocation8], %s23
      %s26 = sshll.u32 [#allocation7], 4
      %s27 = int_to_ptr.vmem [resolvable:$true] %s26
      %29 = dma.hbm_to_vmem [thread:$0]  %s1, 128, %s27, [#allocation8]
    $region9: #{tpu_custom_call.1} parent=1 // pred_fallthru
      _
    // Predicated region
    $region10: #{tpu_custom_call.1} parent=1 // pred_check
      _
    $region11: #{tpu_custom_call.1} parent=1 // pred_check_branch
      %31 = sbr.rel (0) target = $region13
    $region12: #{tpu_custom_call.1} parent=1 // pred_region
      %32 = dma.done [#allocation5], 128
    $region13: #{tpu_custom_call.1} parent=1 // pred_fallthru
      _
    // Predicated region
    $region14: #{tpu_custom_call.1} parent=1 // pred_check
      _
    $region15: #{tpu_custom_call.1} parent=1 // pred_check_branch
      %34 = sbr.rel (0) target = $region17
    $region16: #{tpu_custom_call.1} parent=1 // pred_region
      %35 = dma.done [#allocation8], 128
    $region17: #{tpu_custom_call.1} parent=1 // pred_fallthru
      _
    %p36 = scmp.eq.s32.totalorder 0, 0
    // Predicated region
    $region18: #{tpu_custom_call.1} parent=1 // pred_check
      %p37 = pneg %p36
    $region19: #{tpu_custom_call.1} parent=1 // pred_check_branch
      %39 = sbr.rel (%p37) target = $region21
    $region20: #{tpu_custom_call.1} parent=1 // pred_region
      %40 = vst [vmem:[#allocation2] sm:$0xff] 0.0
      %41 = vst [vmem:[#allocation3] sm:$0xff] 0.0
    $region21: #{tpu_custom_call.1} parent=1 // pred_fallthru
      _
    %v42 = vld [vmem:[#allocation4] sm:$0xff]
    %v43 = vld [vmem:[#allocation7] sm:$0xff]
    %v44 = vlaneseq
    %v45 = vshrl.u32 %v44, 7
    %s46 = smul.u32 0, 8
    %v47 = vstv %s46
    %v48 = vadd.s32 %v45, %v47
    %vm49 = vcmp.lt.s32.totalorder %v48, 1
    %vm50 = vcmp.ge.f32.partialorder %v43, 0.0
    %vm51 = vmand %vm49, %vm50
    %v52 = vld [vmem:[#allocation2] sm:$0xff]
    %v53 = vsub.f32 %v42, %v43
    %v54 = vand.u32 2147483647, %v53
    %v55 = vsel %vm51, %v54, 0.0
    %v56 = vadd.f32 %v52, %v55
    %57 = vst [vmem:[#allocation2] sm:$0xff] %v56
    %v58 = vld [vmem:[#allocation3] sm:$0xff]
    %v59 = vsel %vm51, 1.0, 0.0
    %v60 = vadd.f32 %v58, %v59
    %61 = vst [vmem:[#allocation3] sm:$0xff] %v60
    // Predicated region
    $region22: #{tpu_custom_call.1} parent=1 // pred_check
      %p62 = pneg %p36
    $region23: #{tpu_custom_call.1} parent=1 // pred_check_branch
      %64 = sbr.rel (%p62) target = $region25
    $region24: #{tpu_custom_call.1} parent=1 // pred_region
      %v65 = vld [vmem:[#allocation2] sm:$0xff]
      %66 = vadd.xlane.f32.xlu0 %v65
      %v67 = vpop.xlane.xlu0 %66
      %v68 = vrot.slane %v67, 4
      %v69 = vadd.f32 %v67, %v68
      %v70 = vrot.slane %v69, 2
      %v71 = vadd.f32 %v69, %v70
      %v72 = vrot.slane %v71, 1
      %v73 = vadd.f32 %v71, %v72
      %s74 = vtos %v73
      %v75 = vstv %s74
      %v76 = vld [vmem:[#allocation3] sm:$0xff]
      %77 = vadd.xlane.f32.xlu0 %v76
      %v78 = vpop.xlane.xlu0 %77
      %v79 = vrot.slane %v78, 4
      %v80 = vadd.f32 %v78, %v79
      %v81 = vrot.slane %v80, 2
      %v82 = vadd.f32 %v80, %v81
      %v83 = vrot.slane %v82, 1
      %v84 = vadd.f32 %v82, %v83
      %s85 = vtos %v84
      %v86 = vstv %s85
      %v87 = vrcp.pop %v86
      %v88 = vmul.f32 %v75, %v87
      %vm89 = vcmask 0
      %90 = vst.msk [vmem:[#allocation9] sm:$0x1] %vm89, %v88
    $region25: #{tpu_custom_call.1} parent=1 // pred_fallthru
      _
    // Predicated region
    $region26: #{tpu_custom_call.1} parent=1 // pred_check
      _
    $region27: #{tpu_custom_call.1} parent=1 // pred_check_branch
      %92 = sbr.rel (0) target = $region29
    $region28: #{tpu_custom_call.1} parent=1 // pred_region
      %s94 = ssub.s32 16, 16
      %95 = vsyncadd [#allocation6], %s94
      %s97 = sshll.u32 [#allocation9], 4
      %s98 = int_to_ptr.vmem [resolvable:$true] %s97
      %100 = dma.vmem_to_hbm [thread:$0]  %s98, 16, %s2, [#allocation6]
    $region29: #{tpu_custom_call.1} parent=1 // pred_fallthru
      _
    // Predicated region
    $region30: #{tpu_custom_call.1} parent=1 // pred_check
      _
    $region31: #{tpu_custom_call.1} parent=1 // pred_check_branch
      %102 = sbr.rel (0) target = $region33
    $region32: #{tpu_custom_call.1} parent=1 // pred_region
      %103 = dma.done [#allocation6], 16
    $region33: #{tpu_custom_call.1} parent=1 // pred_fallthru
      _
    %104 = vsyncpa [#allocation5], 1
    %105 = vsyncpa [#allocation8], 1
    %106 = vsyncpa [#allocation6], 1

</llo_original>
